<compile_context>
chip_gen: v5e
topology: v5e:2x2
jax: 0.10.0
libtpu: 0.0.40
codegen_flags: <defaults>
</compile_context>

<pallas_src>
import jax
import jax.numpy as jnp
from jax.experimental import pallas as pl
from jax.experimental.pallas import tpu as pltpu

_LANES = 128
_MAX_TILE_ROWS = 8192   # 8192 * 128 * 4 B = 4 MiB per output buffer


def scalar_kernel(w_ref, o_ref):
    # w_ref: (1,) f32 in SMEM.  o_ref: (tile_r, 128) f32 output block in VMEM.
    w = w_ref[0]
    wv = jnp.full((1, 1), w, jnp.float32)
    s = 1.0 / (1.0 + jnp.exp(-wv))                 # sigmoid(w); exp runs on the idle EUP
    o_ref[...] = jnp.broadcast_to(s, o_ref.shape).astype(o_ref.dtype)


def scalar_forward(x, w):
    """out[i, 0] = sigmoid(w) for i in range(x.shape[0])  (matches scalar.forward)."""
    B = int(x.shape[0])
    w1 = jnp.asarray(w, jnp.float32).reshape(1)

    # Lane-dense slab: R rows of 128 lanes, rows padded to a sublane multiple of 8.
    rows = pl.cdiv(B, _LANES)
    rows = max(8, ((rows + 7) // 8) * 8)
    tile_r = min(rows, _MAX_TILE_ROWS)
    grid = (pl.cdiv(rows, tile_r),)                # usually (1,); ragged last tile OK

    slab = pl.pallas_call(
        scalar_kernel,
        out_shape=jax.ShapeDtypeStruct((rows, _LANES), jnp.float32),
        grid_spec=pltpu.PrefetchScalarGridSpec(
            num_scalar_prefetch=0,
            grid=grid,
            in_specs=[pl.BlockSpec(memory_space=pltpu.MemorySpace.SMEM)],  # w scalar in SMEM
            out_specs=pl.BlockSpec((tile_r, _LANES), lambda i: (i, 0)),
        ),
        compiler_params=pltpu.CompilerParams(
            dimension_semantics=("parallel",),     # output tiles are independent (megacore)
        ),
    )(w1)

    # Free layout plumbing back to the module's (B, 1) shape.
    return slab.reshape(-1, 1)[:B]


def scalar_forward_xla(x, w):
    # Non-Pallas optimum for this op: a single XLA broadcast fill.
    return jnp.full((x.shape[0], 1), jax.nn.sigmoid(jnp.float32(w)), jnp.float32)


def reference_forward(x, w):
    # Pure-JAX reference of scalar.forward: sigmoid(w * ones(B, 1))
    B = x.shape[0]
    return jax.nn.sigmoid(jnp.float32(w) * jnp.ones((B, 1), jnp.float32))


if __name__ == "__main__":
    key = jax.random.PRNGKey(0)

    # scalar(init_weights=0.5): w = tensor(1.0) * init_weights
    init_w = 0.5
    w = jnp.float32(1.0) * jnp.float32(init_w)

    # Small example input consistent with the module (only the batch dim matters).
    batch, feat = 8, 16
    x = jax.random.normal(key, (batch, feat), jnp.float32)

    out = jax.block_until_ready(scalar_forward(x, w))
    ref = reference_forward(x, w)

    assert out.shape == (batch, 1)
    assert jnp.allclose(out, ref, atol=1e-6, rtol=1e-6), "mismatch vs JAX reference"

    print("KERNEL_OK")
</pallas_src>

<mosaic_0001>
module attributes {stable_mosaic.version = 11 : i64} {
  func.func @scalar_kernel(%arg0: i32, %arg1: memref<1xf32, #tpu.memory_space<smem>>, %arg2: memref<8x128xf32, #tpu.memory_space<vmem>>) attributes {dimension_semantics = [#tpu.dimension_semantics<parallel>], iteration_bounds = array<i64: 1>, scalar_prefetch = 0 : i64, scratch_operands = 0 : i64, tpu.core_type = #tpu.core_type<tc>, window_params = [{transform_indices = @transform_0, window_bounds = array<i64: 1>}, {transform_indices = @transform_1, window_bounds = array<i64: 8, 128>}]} {
    %c0 = arith.constant 0 : index
    %0 = memref.load %arg1[%c0] : memref<1xf32, #tpu.memory_space<smem>>
    %1 = vector.broadcast %0 : f32 to vector<1x1xf32>
    %cst = arith.constant 0.000000e+00 : f32
    %2 = vector.broadcast %cst : f32 to vector<1x1xf32>
    %3 = arith.subf %2, %1 : vector<1x1xf32>
    %4 = math.exp %3 : vector<1x1xf32>
    %cst_0 = arith.constant 1.000000e+00 : f32
    %5 = vector.broadcast %cst_0 : f32 to vector<1x1xf32>
    %6 = arith.addf %5, %4 : vector<1x1xf32>
    %cst_1 = arith.constant 1.000000e+00 : f32
    %7 = vector.broadcast %cst_1 : f32 to vector<1x1xf32>
    %8 = arith.divf %7, %6 : vector<1x1xf32>
    %9 = vector.shape_cast %8 : vector<1x1xf32> to vector<1x1xf32>
    %10 = vector.broadcast %9 : vector<1x1xf32> to vector<8x128xf32>
    %c0_2 = arith.constant 0 : index
    %c0_3 = arith.constant 0 : index
    %11 = vector.load %arg2[%c0_2, %c0_3] : memref<8x128xf32, #tpu.memory_space<vmem>>, vector<8x128xf32>
    tpu.vector_store %arg2[%c0_2, %c0_3], %10 {strides = array<i32>} : memref<8x128xf32, #tpu.memory_space<vmem>>, vector<8x128xf32>,
    return
  }
  func.func @transform_0(%arg0: i32) -> i32 {
    %c0_i32 = arith.constant 0 : i32
    %c0_i32_0 = arith.constant 0 : i32
    return %c0_i32 : i32
  }
  func.func @transform_1(%arg0: i32) -> (i32, i32) {
    %c0_i32 = arith.constant 0 : i32
    %c0_i32_0 = arith.constant 0 : i32
    return %arg0, %c0_i32 : i32, i32
  }
}

</mosaic_0001>

<llo_original>
// kernel: tpu_custom_call.1
$region0: #{tpu_custom_call.1}
  #allocation0 [shape = 'u32[]', space=smem, size = 0x4, offset = 0x4, fixed_abs, tag = 'smem constant byte address 0x4 - core index']
  #allocation1 [shape = 'u32[72,128]{1,0:T(1,128)}', space=vmem, size = 0x9000, scoped, tag = 'internal scratch']
  #allocation2 [shape = 'f32[1]{0:T(128)S(6)}', space=smem, size = 0x200, scoped, tag = 'scoped memory for tpu_custom_call.1']
  %s0 = inlined_call_operand.<no memory space> [shape: f32[1], index: 0, kind: input, shape index: {}]
  %s1 = inlined_call_operand.hbm [shape: f32[8,128], index: 1, kind: output, shape index: {}]
  %s2 = sld [smem:[#allocation0]]
  $region14: #{tpu_custom_call.1} parent=0
    _
  %s4 = ssub.s32 1, %s2
  %s5 = scalar_select 0, %s4, %s2
  %6 = sst [smem:[#allocation2]] %s0
  $region1: #{tpu_custom_call.1} parent=0
    #allocation3 [shape = 'u8[4096]{0}', space=vmem, size = 0x1000, scoped, tag = 'output window, operand 0, single buffered']
    #allocation4 [shape = 's32[1]{0}', space=sflag, size = 0x4, scoped, tag = 'scoped memory for tpu_custom_call.1']
    %7 = vsyncpa [#allocation4], 0
    // Predicated region
    $region2: #{tpu_custom_call.1} parent=1 // pred_check
      _
    $region3: #{tpu_custom_call.1} parent=1 // pred_check_branch
      %9 = sbr.rel (0) target = $region5
    $region4: #{tpu_custom_call.1} parent=1 // pred_region
      _
    $region5: #{tpu_custom_call.1} parent=1 // pred_fallthru
      _
    %s10 = sld [smem:[#allocation2]]
    %v11 = vstv %s10
    %v12 = vsub.f32 0.0, %v11
    %v13 = vmul.f32 %v12, 1.442695
    %v14 = vpow.pop %v13
    %v15 = vadd.f32 %v14, 1.0
    %v16 = vrcp.pop %v15
    %v17 = vmul.f32 %v15, %v16
    %v18 = vsub.f32 1.0, %v17
    %v19 = vmul.f32 %v16, %v18
    %v20 = vadd.f32 %v16, %v19
    %vm21 = vweird.f32 %v15
    %vm22 = vweird.f32 %v16
    %vm23 = vmor %vm21, %vm22
    %v24 = vsel %vm23, %v16, %v20
    %v25 = vand.u32 2147483647, %v15
    %vm26 = vcmp.eq.f32.partialorder %v25, 8.507059e+37
    %v27 = vand.u32 %v15, 2147483648
    %v28 = vor.u32 1.1754944e-38, %v27
    %v29 = vsel %vm26, %v28, %v24
    %v30 = vmul.f32 1.0, %v29
    %31 = vst [vmem:[#allocation3] sm:$0xff] %v30
    // Predicated region
    $region6: #{tpu_custom_call.1} parent=1 // pred_check
      _
    $region7: #{tpu_custom_call.1} parent=1 // pred_check_branch
      %33 = sbr.rel (0) target = $region9
    $region8: #{tpu_custom_call.1} parent=1 // pred_region
      %35 = vsyncadd [#allocation4], 0
      %s37 = sshll.u32 [#allocation3], 4
      %s38 = int_to_ptr.vmem [resolvable:$true] %s37
      %s39 = sshll.u32 %s1, 4
      %s40 = int_to_ptr.hbm [resolvable:$true] %s39
      %42 = dma.vmem_to_hbm [thread:$0]  %s38, 128, %s40, [#allocation4]
    $region9: #{tpu_custom_call.1} parent=1 // pred_fallthru
      _
    // Predicated region
    $region10: #{tpu_custom_call.1} parent=1 // pred_check
      _
    $region11: #{tpu_custom_call.1} parent=1 // pred_check_branch
      %44 = sbr.rel (0) target = $region13
    $region12: #{tpu_custom_call.1} parent=1 // pred_region
      %46 = dma.done [#allocation4], 128
    $region13: #{tpu_custom_call.1} parent=1 // pred_fallthru
      _
    %47 = vsyncpa [#allocation4], 1

</llo_original>
